<compile_context>
chip_gen: v5e
topology: v5e:2x2
jax: 0.10.0
libtpu: 0.0.40
codegen_flags: <defaults>
</compile_context>

<pallas_src>
import collections
import functools

import jax
import jax.numpy as jnp
from jax.experimental import pallas as pl
from jax.experimental.pallas import tpu as pltpu


Layout = collections.namedtuple("Layout", ["x_dim", "w_dim", "z_dim", "layers"])
# layers: tuple of 5 (row_offset, K, N) static int triples into the weight slab.


def _round_up(v, m):
    return -(-v // m) * m


def _block_diag(A, B):
    ka, na = A.shape
    kb, nb = B.shape
    top = jnp.concatenate([A, jnp.zeros((ka, nb), A.dtype)], axis=1)
    bot = jnp.concatenate([jnp.zeros((kb, na), B.dtype), B], axis=1)
    return jnp.concatenate([top, bot], axis=0)


def pack_params(params):
    """One-time parameter packing (call once, outside the jitted forward).

    Returns (w_slab, b_slab, layout):
      w_slab : [sum(K_pad), slab_width] f32, each fused layer's weight at a
               row offset that is a multiple of 8, columns zero-padded.
      b_slab : [n_layers, slab_width] f32, row i = bias of fused layer i.
      layout : static Layout namedtuple with dims + (row, K, N) per layer.
    """
    (Wex, bex, Wew, bew, Whx, Whw, bh, Wmu, bmu, Wlv, blv,
     Wdx1, bdx1, Wdx2, bdx2, Wdw1, bdw1, Wdw2, bdw2) = params

    x_dim = Wex.shape[0]
    w_dim = Wew.shape[0]
    z_dim = Wmu.shape[1]

    # Fused layers (weight, bias) in execution order.
    fused = [
        (_block_diag(Wex, Wew), jnp.concatenate([bex, bew], axis=1)),   # L0
        (jnp.concatenate([Whx, Whw], axis=0), bh),                      # L1
        (jnp.concatenate([Wmu, Wlv], axis=1),
         jnp.concatenate([bmu, blv], axis=1)),                          # L2
        (jnp.concatenate([Wdx1, Wdw1], axis=1),
         jnp.concatenate([bdx1, bdw1], axis=1)),                        # L3
        (_block_diag(Wdx2, Wdw2), jnp.concatenate([bdx2, bdw2], axis=1)),  # L4
    ]

    max_n = max(W.shape[1] for W, _ in fused)
    slab_width = _round_up(max_n, 128)

    blocks = []
    meta = []
    row = 0
    for W, _ in fused:
        k, n = W.shape
        k_pad = _round_up(k, 8)
        blk = jnp.zeros((k_pad, slab_width), jnp.float32).at[:k, :n].set(
            W.astype(jnp.float32))
        blocks.append(blk)
        meta.append((row, k, n))
        row += k_pad
    w_slab = jnp.concatenate(blocks, axis=0)

    b_slab = jnp.zeros((len(fused), slab_width), jnp.float32)
    for i, (W, b) in enumerate(fused):
        b_slab = b_slab.at[i, :W.shape[1]].set(b[0].astype(jnp.float32))

    layout = Layout(x_dim=x_dim, w_dim=w_dim, z_dim=z_dim, layers=tuple(meta))
    return w_slab, b_slab, layout


def jmvae_kernel(xin_ref, w_ref, b_ref, out_ref, *, layout):
    f32 = jnp.float32
    xd, wd, zd = layout.x_dim, layout.w_dim, layout.z_dim
    L0, L1, L2, L3, L4 = layout.layers

    def dense(act, idx, layer):
        r, k, n = layer
        wmat = w_ref[r:r + k, 0:n]
        bias = b_ref[idx:idx + 1, 0:n]
        return jnp.dot(act, wmat, preferred_element_type=f32) + bias

    # --- split the packed activation slab [x | w | eps] ---
    xw = xin_ref[:, 0:xd + wd]
    eps = xin_ref[:, xd + wd:xd + wd + zd]

    # --- JMVAE.encoder (block-diagonal fused) ---
    hxw = jnp.maximum(dense(xw, 0, L0), 0.0)          # [hx | hw]
    h = jnp.maximum(dense(hxw, 1, L1), 0.0)           # last hidden
    mu_lv = dense(h, 2, L2)                           # [mean | log_var]
    mean = mu_lv[:, 0:zd]
    log_var = mu_lv[:, zd:2 * zd]

    # --- VAE.reparametrize: z = mean + eps * exp(log_var / 2) ---
    z = mean + eps * jnp.exp(log_var * 0.5)

    # --- JMVAE.decoder (block-diagonal fused) ---
    d1 = jnp.maximum(dense(z, 3, L3), 0.0)            # [dx | dw]
    logits = dense(d1, 4, L4)                         # [x-logits | w-logits]

    out_x = jax.nn.sigmoid(logits[:, 0:xd])
    wlog = logits[:, xd:xd + wd]
    m = jnp.max(wlog, axis=-1, keepdims=True)
    e = jnp.exp(wlog - m)
    out_w = e * pl.reciprocal(jnp.sum(e, axis=-1, keepdims=True), approx=True)

    # --- lane-dense packed output: direct static sub-slice stores ---
    tb = out_x.shape[0]
    out_ref[:, 0:xd] = out_x
    out_ref[:, xd:xd + wd] = out_w
    off = xd + wd
    out_ref[:, off:off + 2 * zd] = mu_lv              # [mean | log_var] contiguous
    out_ref[:, off + 2 * zd:off + 3 * zd] = z
    pad0 = off + 3 * zd
    if pad0 < out_ref.shape[1]:
        out_ref[:, pad0:] = jnp.zeros((tb, out_ref.shape[1] - pad0), f32)


@functools.partial(jax.jit, static_argnames=("layout", "tile_b"))
def jmvae_forward(x, w, eps, w_slab, b_slab, *, layout, tile_b=None):
    """JMVAE forward pass.  Returns (out_x, out_w, mean, log_var, z)."""
    B = x.shape[0]
    xd, wd, zd = layout.x_dim, layout.w_dim, layout.z_dim

    # One lane-dense batched input slab (1 DMA instead of 3).
    xin = jnp.concatenate([x, w, eps], axis=1).astype(jnp.float32)
    xin_width = xd + wd + zd

    # Default: one grid step over the whole batch (small B).  For large B
    # (v7x: 2 TensorCores) pass tile_b as a multiple of 8 (e.g. 512-2048).
    if tile_b is None:
        tile_b = B
    assert B % tile_b == 0
    assert tile_b == B or tile_b % 8 == 0
    grid = (B // tile_b,)

    packed_width = xd + wd + 3 * zd
    padded_width = pl.cdiv(packed_width, 128) * 128

    kernel = functools.partial(jmvae_kernel, layout=layout)

    in_specs = [
        pl.BlockSpec((tile_b, xin_width), lambda i: (i, 0)),
        # Constant index maps -> weight/bias slabs stay resident across steps.
        pl.BlockSpec(w_slab.shape, lambda i: (0, 0)),
        pl.BlockSpec(b_slab.shape, lambda i: (0, 0)),
    ]

    packed = pl.pallas_call(
        kernel,
        out_shape=jax.ShapeDtypeStruct((B, padded_width), jnp.float32),
        grid_spec=pltpu.PrefetchScalarGridSpec(
            num_scalar_prefetch=0,
            grid=grid,
            in_specs=in_specs,
            out_specs=pl.BlockSpec((tile_b, padded_width), lambda i: (i, 0)),
        ),
        compiler_params=pltpu.CompilerParams(
            dimension_semantics=("parallel",)),
    )(xin, w_slab, b_slab)

    o = 0
    out_x = packed[:, o:o + xd]; o += xd
    out_w = packed[:, o:o + wd]; o += wd
    mean = packed[:, o:o + zd]; o += zd
    log_var = packed[:, o:o + zd]; o += zd
    z = packed[:, o:o + zd]
    return out_x, out_w, mean, log_var, z


def jmvae_reference(x, w, eps, params):
    """Pure-JAX reference of the same forward pass for validation."""
    (Wex, bex, Wew, bew, Whx, Whw, bh, Wmu, bmu, Wlv, blv,
     Wdx1, bdx1, Wdx2, bdx2, Wdw1, bdw1, Wdw2, bdw2) = params
    relu = jax.nn.relu
    hx = relu(x @ Wex + bex)
    hw = relu(w @ Wew + bew)
    h = relu(jnp.concatenate([hx, hw], axis=1)
             @ jnp.concatenate([Whx, Whw], axis=0) + bh)
    mean = h @ Wmu + bmu
    log_var = h @ Wlv + blv
    z = mean + eps * jnp.exp(log_var / 2.0)
    dx = relu(z @ Wdx1 + bdx1)
    out_x = jax.nn.sigmoid(dx @ Wdx2 + bdx2)
    dw = relu(z @ Wdw1 + bdw1)
    out_w = jax.nn.softmax(dw @ Wdw2 + bdw2, axis=1)
    return out_x, out_w, mean, log_var, z


def make_params(key, x_dim, w_dim, z_dim, enc_hx, enc_hw, dec_hx, dec_hw):
    """Deterministic synthetic parameter init (Linear weights as [in, out])."""
    dims = [
        (x_dim, enc_hx[0]), (1, enc_hx[0]),            # Wex, bex
        (w_dim, enc_hw[0]), (1, enc_hw[0]),            # Wew, bew
        (enc_hx[-2], enc_hx[-1]),                      # Whx  (h2last_h split, x part)
        (enc_hw[-2], enc_hw[-1]),                      # Whw  (h2last_h split, w part)
        (1, enc_hx[-1]),                               # bh
        (enc_hx[-1], z_dim), (1, z_dim),               # Wmu, bmu
        (enc_hx[-1], z_dim), (1, z_dim),               # Wlv, blv
        (z_dim, dec_hx[0]), (1, dec_hx[0]),            # Wdx1, bdx1
        (dec_hx[0], x_dim), (1, x_dim),                # Wdx2, bdx2
        (z_dim, dec_hw[0]), (1, dec_hw[0]),            # Wdw1, bdw1
        (dec_hw[0], w_dim), (1, w_dim),                # Wdw2, bdw2
    ]
    keys = jax.random.split(key, len(dims))
    return tuple(0.1 * jax.random.normal(k, d, dtype=jnp.float32)
                 for k, d in zip(keys, dims))


if __name__ == "__main__":
    # Small shapes consistent with the module's constructor arguments.
    B = 16
    x_dim, w_dim, z_dim = 32, 16, 8
    encoder_hx_dim = [64, 32]
    encoder_hw_dim = [48, 32]   # last dims of both encoders must match
    decoder_hx_dim = [64]
    decoder_hw_dim = [48]

    root = jax.random.PRNGKey(0)
    k_x, k_w, k_eps, k_p = jax.random.split(root, 4)
    x = jax.random.normal(k_x, (B, x_dim), dtype=jnp.float32)
    w = jax.random.normal(k_w, (B, w_dim), dtype=jnp.float32)
    # eps for the reparametrization trick (randn_like(mean)), drawn outside the kernel.
    eps = jax.random.normal(k_eps, (B, z_dim), dtype=jnp.float32)

    params = make_params(k_p, x_dim, w_dim, z_dim,
                         encoder_hx_dim, encoder_hw_dim,
                         decoder_hx_dim, decoder_hw_dim)

    # One-time packing of all weights/biases into lane-dense slabs.
    w_slab, b_slab, layout = pack_params(params)

    out_x, out_w, mean, log_var, z = jax.block_until_ready(
        jmvae_forward(x, w, eps, w_slab, b_slab, layout=layout))

    ref_x, ref_w, ref_mean, ref_lv, ref_z = jmvae_reference(x, w, eps, params)
    assert jnp.allclose(out_x, ref_x, atol=1e-5, rtol=1e-5)
    # out_w uses approx reciprocal on the softmax denominator (~2^-12 rel err).
    assert jnp.allclose(out_w, ref_w, atol=1e-3, rtol=1e-3)
    assert jnp.allclose(mean, ref_mean, atol=1e-5, rtol=1e-5)
    assert jnp.allclose(log_var, ref_lv, atol=1e-5, rtol=1e-5)
    assert jnp.allclose(z, ref_z, atol=1e-5, rtol=1e-5)

    print("KERNEL_OK")
</pallas_src>

<mosaic_0001>
module attributes {stable_mosaic.version = 11 : i64} {
  func.func @jmvae_kernel(%arg0: i32, %arg1: memref<16x56xf32, #tpu.memory_space<vmem>>, %arg2: memref<312x128xf32, #tpu.memory_space<vmem>>, %arg3: memref<5x128xf32, #tpu.memory_space<vmem>>, %arg4: memref<16x128xf32, #tpu.memory_space<vmem>>) attributes {dimension_semantics = [#tpu.dimension_semantics<parallel>], iteration_bounds = array<i64: 1>, scalar_prefetch = 0 : i64, scratch_operands = 0 : i64, tpu.core_type = #tpu.core_type<tc>, window_params = [{transform_indices = @transform_0, window_bounds = array<i64: 16, 56>}, {pipeline_mode = #tpu.pipeline_mode<synchronous>, transform_indices = @transform_1, window_bounds = array<i64: 312, 128>}, {pipeline_mode = #tpu.pipeline_mode<synchronous>, transform_indices = @transform_2, window_bounds = array<i64: 5, 128>}, {transform_indices = @transform_3, window_bounds = array<i64: 16, 128>}]} {
    %c0 = arith.constant 0 : index
    %c0_0 = arith.constant 0 : index
    %0 = vector.load %arg1[%c0, %c0_0] : memref<16x56xf32, #tpu.memory_space<vmem>>, vector<16x48xf32>
    %c0_1 = arith.constant 0 : index
    %c48 = arith.constant 48 : index
    %1 = vector.load %arg1[%c0_1, %c48] : memref<16x56xf32, #tpu.memory_space<vmem>>, vector<16x8xf32>
    %c0_2 = arith.constant 0 : index
    %c0_3 = arith.constant 0 : index
    %2 = vector.load %arg2[%c0_2, %c0_3] : memref<312x128xf32, #tpu.memory_space<vmem>>, vector<48x112xf32>
    %c0_4 = arith.constant 0 : index
    %c0_5 = arith.constant 0 : index
    %3 = vector.load %arg3[%c0_4, %c0_5] : memref<5x128xf32, #tpu.memory_space<vmem>>, vector<1x112xf32>
    %cst = arith.constant dense<0.000000e+00> : vector<16x112xf32>
    %4 = tpu.matmul %0, %2, %cst {dimension_numbers = #tpu.dot_dimension_numbers<[1], [0], [0], [1], [0, 0, 1, 1], [], []>} : vector<16x48xf32>, vector<48x112xf32>, vector<16x112xf32> -> vector<16x112xf32>
    %5 = vector.broadcast %3 : vector<1x112xf32> to vector<16x112xf32>
    %6 = arith.addf %4, %5 : vector<16x112xf32>
    %cst_6 = arith.constant 0.000000e+00 : f32
    %7 = vector.broadcast %cst_6 : f32 to vector<16x112xf32>
    %8 = arith.maximumf %6, %7 : vector<16x112xf32>
    %c48_7 = arith.constant 48 : index
    %c0_8 = arith.constant 0 : index
    %9 = vector.load %arg2[%c48_7, %c0_8] : memref<312x128xf32, #tpu.memory_space<vmem>>, vector<112x32xf32>
    %c1 = arith.constant 1 : index
    %c0_9 = arith.constant 0 : index
    %10 = vector.load %arg3[%c1, %c0_9] : memref<5x128xf32, #tpu.memory_space<vmem>>, vector<1x32xf32>
    %cst_10 = arith.constant dense<0.000000e+00> : vector<16x32xf32>
    %11 = tpu.matmul %8, %9, %cst_10 {dimension_numbers = #tpu.dot_dimension_numbers<[1], [0], [0], [1], [0, 0, 1, 1], [], []>} : vector<16x112xf32>, vector<112x32xf32>, vector<16x32xf32> -> vector<16x32xf32>
    %12 = vector.broadcast %10 : vector<1x32xf32> to vector<16x32xf32>
    %13 = arith.addf %11, %12 : vector<16x32xf32>
    %cst_11 = arith.constant 0.000000e+00 : f32
    %14 = vector.broadcast %cst_11 : f32 to vector<16x32xf32>
    %15 = arith.maximumf %13, %14 : vector<16x32xf32>
    %c160 = arith.constant 160 : index
    %c0_12 = arith.constant 0 : index
    %16 = vector.load %arg2[%c160, %c0_12] : memref<312x128xf32, #tpu.memory_space<vmem>>, vector<32x16xf32>
    %c2 = arith.constant 2 : index
    %c0_13 = arith.constant 0 : index
    %17 = vector.load %arg3[%c2, %c0_13] : memref<5x128xf32, #tpu.memory_space<vmem>>, vector<1x16xf32>
    %cst_14 = arith.constant dense<0.000000e+00> : vector<16x16xf32>
    %18 = tpu.matmul %15, %16, %cst_14 {dimension_numbers = #tpu.dot_dimension_numbers<[1], [0], [0], [1], [0, 0, 1, 1], [], []>} : vector<16x32xf32>, vector<32x16xf32>, vector<16x16xf32> -> vector<16x16xf32>
    %19 = vector.broadcast %17 : vector<1x16xf32> to vector<16x16xf32>
    %20 = arith.addf %18, %19 : vector<16x16xf32>
    %21 = vector.extract_strided_slice %20 {offsets = [0, 0], sizes = [16, 8], strides = [1, 1]} : vector<16x16xf32> to vector<16x8xf32>
    %22 = vector.extract_strided_slice %20 {offsets = [0, 8], sizes = [16, 8], strides = [1, 1]} : vector<16x16xf32> to vector<16x8xf32>
    %cst_15 = arith.constant 5.000000e-01 : f32
    %23 = vector.broadcast %cst_15 : f32 to vector<16x8xf32>
    %24 = arith.mulf %22, %23 : vector<16x8xf32>
    %25 = math.exp %24 : vector<16x8xf32>
    %26 = arith.mulf %1, %25 : vector<16x8xf32>
    %27 = arith.addf %21, %26 : vector<16x8xf32>
    %c192 = arith.constant 192 : index
    %c0_16 = arith.constant 0 : index
    %28 = vector.load %arg2[%c192, %c0_16] : memref<312x128xf32, #tpu.memory_space<vmem>>, vector<8x112xf32>
    %c3 = arith.constant 3 : index
    %c0_17 = arith.constant 0 : index
    %29 = vector.load %arg3[%c3, %c0_17] : memref<5x128xf32, #tpu.memory_space<vmem>>, vector<1x112xf32>
    %cst_18 = arith.constant dense<0.000000e+00> : vector<16x112xf32>
    %30 = tpu.matmul %27, %28, %cst_18 {dimension_numbers = #tpu.dot_dimension_numbers<[1], [0], [0], [1], [0, 0, 1, 1], [], []>} : vector<16x8xf32>, vector<8x112xf32>, vector<16x112xf32> -> vector<16x112xf32>
    %31 = vector.broadcast %29 : vector<1x112xf32> to vector<16x112xf32>
    %32 = arith.addf %30, %31 : vector<16x112xf32>
    %cst_19 = arith.constant 0.000000e+00 : f32
    %33 = vector.broadcast %cst_19 : f32 to vector<16x112xf32>
    %34 = arith.maximumf %32, %33 : vector<16x112xf32>
    %c200 = arith.constant 200 : index
    %c0_20 = arith.constant 0 : index
    %35 = vector.load %arg2[%c200, %c0_20] : memref<312x128xf32, #tpu.memory_space<vmem>>, vector<112x48xf32>
    %c4 = arith.constant 4 : index
    %c0_21 = arith.constant 0 : index
    %36 = vector.load %arg3[%c4, %c0_21] : memref<5x128xf32, #tpu.memory_space<vmem>>, vector<1x48xf32>
    %cst_22 = arith.constant dense<0.000000e+00> : vector<16x48xf32>
    %37 = tpu.matmul %34, %35, %cst_22 {dimension_numbers = #tpu.dot_dimension_numbers<[1], [0], [0], [1], [0, 0, 1, 1], [], []>} : vector<16x112xf32>, vector<112x48xf32>, vector<16x48xf32> -> vector<16x48xf32>
    %38 = vector.broadcast %36 : vector<1x48xf32> to vector<16x48xf32>
    %39 = arith.addf %37, %38 : vector<16x48xf32>
    %40 = vector.extract_strided_slice %39 {offsets = [0, 0], sizes = [16, 32], strides = [1, 1]} : vector<16x48xf32> to vector<16x32xf32>
    %41 = arith.negf %40 : vector<16x32xf32>
    %42 = math.exp %41 : vector<16x32xf32>
    %cst_23 = arith.constant 1.000000e+00 : f32
    %43 = vector.broadcast %cst_23 : f32 to vector<16x32xf32>
    %44 = arith.addf %43, %42 : vector<16x32xf32>
    %45 = arith.divf %43, %44 : vector<16x32xf32>
    %46 = vector.extract_strided_slice %39 {offsets = [0, 32], sizes = [16, 16], strides = [1, 1]} : vector<16x48xf32> to vector<16x16xf32>
    %cst_24 = arith.constant dense<0xFF800000> : vector<16xf32>
    %47 = vector.multi_reduction <maximumf>, %46, %cst_24 [1] : vector<16x16xf32> to vector<16xf32>
    %48 = vector.shape_cast %47 : vector<16xf32> to vector<16x1xf32>
    %49 = vector.broadcast %48 : vector<16x1xf32> to vector<16x16xf32>
    %50 = arith.subf %46, %49 : vector<16x16xf32>
    %51 = math.exp %50 : vector<16x16xf32>
    %cst_25 = arith.constant dense<0.000000e+00> : vector<16xf32>
    %52 = vector.multi_reduction <add>, %51, %cst_25 [1] : vector<16x16xf32> to vector<16xf32>
    %53 = vector.shape_cast %52 : vector<16xf32> to vector<16x1xf32>
    %54 = tpu.reciprocal %53 {approx = true} : vector<16x1xf32> -> vector<16x1xf32>
    %55 = vector.broadcast %54 : vector<16x1xf32> to vector<16x16xf32>
    %56 = arith.mulf %51, %55 : vector<16x16xf32>
    %c0_26 = arith.constant 0 : index
    %c0_27 = arith.constant 0 : index
    %57 = vector.load %arg4[%c0_26, %c0_27] : memref<16x128xf32, #tpu.memory_space<vmem>>, vector<16x32xf32>
    tpu.vector_store %arg4[%c0_26, %c0_27], %45 {strides = array<i32>} : memref<16x128xf32, #tpu.memory_space<vmem>>, vector<16x32xf32>,
    %c0_28 = arith.constant 0 : index
    %c32 = arith.constant 32 : index
    %58 = vector.load %arg4[%c0_28, %c32] : memref<16x128xf32, #tpu.memory_space<vmem>>, vector<16x16xf32>
    tpu.vector_store %arg4[%c0_28, %c32], %56 {strides = array<i32>} : memref<16x128xf32, #tpu.memory_space<vmem>>, vector<16x16xf32>,
    %c0_29 = arith.constant 0 : index
    %c48_30 = arith.constant 48 : index
    %59 = vector.load %arg4[%c0_29, %c48_30] : memref<16x128xf32, #tpu.memory_space<vmem>>, vector<16x16xf32>
    tpu.vector_store %arg4[%c0_29, %c48_30], %20 {strides = array<i32>} : memref<16x128xf32, #tpu.memory_space<vmem>>, vector<16x16xf32>,
    %c0_31 = arith.constant 0 : index
    %c64 = arith.constant 64 : index
    %60 = vector.load %arg4[%c0_31, %c64] : memref<16x128xf32, #tpu.memory_space<vmem>>, vector<16x8xf32>
    tpu.vector_store %arg4[%c0_31, %c64], %27 {strides = array<i32>} : memref<16x128xf32, #tpu.memory_space<vmem>>, vector<16x8xf32>,
    %cst_32 = arith.constant 0.000000e+00 : f32
    %61 = vector.broadcast %cst_32 : f32 to vector<16x56xf32>
    %c0_33 = arith.constant 0 : index
    %c72 = arith.constant 72 : index
    %62 = vector.load %arg4[%c0_33, %c72] : memref<16x128xf32, #tpu.memory_space<vmem>>, vector<16x56xf32>
    tpu.vector_store %arg4[%c0_33, %c72], %61 {strides = array<i32>} : memref<16x128xf32, #tpu.memory_space<vmem>>, vector<16x56xf32>,
    return
  }
  func.func @transform_0(%arg0: i32) -> (i32, i32) {
    %c0_i32 = arith.constant 0 : i32
    %c0_i32_0 = arith.constant 0 : i32
    return %arg0, %c0_i32 : i32, i32
  }
  func.func @transform_1(%arg0: i32) -> (i32, i32) {
    %c0_i32 = arith.constant 0 : i32
    %c0_i32_0 = arith.constant 0 : i32
    %c0_i32_1 = arith.constant 0 : i32
    return %c0_i32, %c0_i32_0 : i32, i32
  }
  func.func @transform_2(%arg0: i32) -> (i32, i32) {
    %c0_i32 = arith.constant 0 : i32
    %c0_i32_0 = arith.constant 0 : i32
    %c0_i32_1 = arith.constant 0 : i32
    return %c0_i32, %c0_i32_0 : i32, i32
  }
  func.func @transform_3(%arg0: i32) -> (i32, i32) {
    %c0_i32 = arith.constant 0 : i32
    %c0_i32_0 = arith.constant 0 : i32
    return %arg0, %c0_i32 : i32, i32
  }
}

</mosaic_0001>

<llo_original>
// kernel: jmvae_forward.1
$region0: #{jmvae_forward.1}
  #allocation0 [shape = 'u32[]', space=smem, size = 0x4, offset = 0x4, fixed_abs, tag = 'smem constant byte address 0x4 - core index']
  #allocation1 [shape = 'u32[72,128]{1,0:T(1,128)}', space=vmem, size = 0x9000, scoped, tag = 'internal scratch']
  %s0 = inlined_call_operand.vmem [shape: f32[16,56], index: 0, kind: input, shape index: {}]
  %s1 = inlined_call_operand.hbm [shape: f32[312,128], index: 1, kind: input, shape index: {}]
  %s2 = inlined_call_operand.vmem [shape: f32[5,128], index: 2, kind: input, shape index: {}]
  %s3 = inlined_call_operand.vmem [shape: f32[16,128], index: 3, kind: output, shape index: {}]
  %s4 = sld [smem:[#allocation0]]
  $region26: #{jmvae_forward.1} parent=0
    _
  %s6 = ssub.s32 1, %s4
  %s7 = scalar_select 0, %s6, %s4
  $region1: #{jmvae_forward.1} parent=0
    #allocation2 [shape = 'u8[159744]{0}', space=vmem, size = 0x27000, scoped, tag = 'input window, operand 1, single buffered']
    #allocation3 [shape = 's32[1]{0}', space=sflag, size = 0x4, scoped, tag = 'scoped memory for jmvae_forward.1']
    %8 = vsyncpa [#allocation3], 0
    // Predicated region
    $region2: #{jmvae_forward.1} parent=1 // pred_check
      _
    $region3: #{jmvae_forward.1} parent=1 // pred_check_branch
      %10 = sbr.rel (0) target = $region5
    $region4: #{jmvae_forward.1} parent=1 // pred_region
      _
    $region5: #{jmvae_forward.1} parent=1 // pred_fallthru
      _
    // Predicated region
    $region6: #{jmvae_forward.1} parent=1 // pred_check
      _
    $region7: #{jmvae_forward.1} parent=1 // pred_check_branch
      %12 = sbr.rel (0) target = $region9
    $region8: #{jmvae_forward.1} parent=1 // pred_region
      %14 = vsyncadd [#allocation3], 0
      %s15 = sshll.u32 %s1, 4
      %s16 = int_to_ptr.hbm [resolvable:$true] %s15
      %s17 = sshll.u32 [#allocation2], 4
      %s18 = int_to_ptr.vmem [resolvable:$true] %s17
      %23 = dma.hbm_to_vmem [thread:$0]  %s16, 4992, %s18, [#allocation3], 128, 128, 8
    $region9: #{jmvae_forward.1} parent=1 // pred_fallthru
      _
    // Predicated region
    $region10: #{jmvae_forward.1} parent=1 // pred_check
      _
    $region11: #{jmvae_forward.1} parent=1 // pred_check_branch
      %25 = sbr.rel (0) target = $region13
    $region12: #{jmvae_forward.1} parent=1 // pred_region
      _
    $region13: #{jmvae_forward.1} parent=1 // pred_fallthru
      _
    // Predicated region
    $region14: #{jmvae_forward.1} parent=1 // pred_check
      _
    $region15: #{jmvae_forward.1} parent=1 // pred_check_branch
      %27 = sbr.rel (0) target = $region17
    $region16: #{jmvae_forward.1} parent=1 // pred_region
      %29 = dma.done [#allocation3], 4992
    $region17: #{jmvae_forward.1} parent=1 // pred_fallthru
      _
    %v30 = vld [vmem:[%s0] sm:$0xff]
    %v31 = vld [vmem:[%s0 + $0x8] sm:$0xff]
    %v32 = vld [vmem:[#allocation2] sm:$0xff]
    %v33 = vld [vmem:[#allocation2 + $0x8] sm:$0xff]
    %v34 = vld [vmem:[#allocation2 + $0x10] sm:$0xff]
    %v35 = vld [vmem:[#allocation2 + $0x18] sm:$0xff]
    %v36 = vld [vmem:[#allocation2 + $0x20] sm:$0xff]
    %v37 = vld [vmem:[#allocation2 + $0x28] sm:$0xff]
    %v38 = vld [vmem:[%s2] sm:$0x1]
    %v39 = vperm.slane %v38, 0
    %vm40 = vcmask 392192
    %v42 = vsel %vm40, %v30, 0
    %v45 = vsel %vm40, %v31, 0
    %47 = vmatpush.msra.mxu0 0.0
    %48 = vmatpush.msra.mxu0 0.0
    %49 = vmatpush.msra.mxu0 0.0
    %50 = vmatpush.msra.mxu0 0.0
    %51 = vmatpush.msra.mxu0 0.0
    %52 = vmatpush.msra.mxu0 0.0
    %53 = vmatpush.msra.mxu0 0.0
    %54 = vmatpush.msra.mxu0 0.0
    %55 = vmatpush.msra.mxu0 0.0
    %56 = vmatpush.msra.mxu0 0.0
    %57 = vmatpush.msra.mxu0 %v37
    %58 = vmatpush.msra.mxu0 %v36
    %59 = vmatpush.msra.mxu0 %v35
    %60 = vmatpush.msra.mxu0 %v34
    %61 = vmatpush.msra.mxu0 %v33
    %62 = vmatpush.msra.mxu0 %v32
    %63 = vmatmul.f32.gmra.mxu0 %v42
    %v64 = vpop.f32.mrf.mxu0
    %v65 = vadd.f32 %v39, %v64
    %66 = vmatmul.f32.gmra.mxu0 %v45
    %v67 = vpop.f32.mrf.mxu0
    %v68 = vadd.f32 %v39, %v67
    %69 = vdwg.mxu0
    %v70 = vmax.f32 %v65, 0.0
    %v71 = vmax.f32 %v68, 0.0
    %v72 = vld [vmem:[#allocation2 + $0x30] sm:$0xff]
    %v73 = vld [vmem:[#allocation2 + $0x38] sm:$0xff]
    %v74 = vld [vmem:[#allocation2 + $0x40] sm:$0xff]
    %v75 = vld [vmem:[#allocation2 + $0x48] sm:$0xff]
    %v76 = vld [vmem:[#allocation2 + $0x50] sm:$0xff]
    %v77 = vld [vmem:[#allocation2 + $0x58] sm:$0xff]
    %v78 = vld [vmem:[#allocation2 + $0x60] sm:$0xff]
    %v79 = vld [vmem:[#allocation2 + $0x68] sm:$0xff]
    %v80 = vld [vmem:[#allocation2 + $0x70] sm:$0xff]
    %v81 = vld [vmem:[#allocation2 + $0x78] sm:$0xff]
    %v82 = vld [vmem:[#allocation2 + $0x80] sm:$0xff]
    %v83 = vld [vmem:[#allocation2 + $0x88] sm:$0xff]
    %v84 = vld [vmem:[#allocation2 + $0x90] sm:$0xff]
    %v85 = vld [vmem:[#allocation2 + $0x98] sm:$0xff]
    %v86 = vld [vmem:[%s2 + $0x1] sm:$0x1]
    %v87 = vperm.slane %v86, 0
    %vm88 = vcmask 916480
    %v90 = vsel %vm88, %v70, 0
    %v93 = vsel %vm88, %v71, 0
    %95 = vmatpush.msra.mxu0 0.0
    %96 = vmatpush.msra.mxu0 0.0
    %97 = vmatpush.msra.mxu0 %v85
    %98 = vmatpush.msra.mxu0 %v84
    %99 = vmatpush.msra.mxu0 %v83
    %100 = vmatpush.msra.mxu0 %v82
    %101 = vmatpush.msra.mxu0 %v81
    %102 = vmatpush.msra.mxu0 %v80
    %103 = vmatpush.msra.mxu0 %v79
    %104 = vmatpush.msra.mxu0 %v78
    %105 = vmatpush.msra.mxu0 %v77
    %106 = vmatpush.msra.mxu0 %v76
    %107 = vmatpush.msra.mxu0 %v75
    %108 = vmatpush.msra.mxu0 %v74
    %109 = vmatpush.msra.mxu0 %v73
    %110 = vmatpush.msra.mxu0 %v72
    %111 = vmatmul.f32.gmra.mxu0 %v90
    %v112 = vpop.f32.mrf.mxu0
    %v113 = vadd.f32 %v87, %v112
    %114 = vmatmul.f32.gmra.mxu0 %v93
    %v115 = vpop.f32.mrf.mxu0
    %v116 = vadd.f32 %v87, %v115
    %117 = vdwg.mxu0
    %v118 = vmax.f32 %v113, 0.0
    %v119 = vmax.f32 %v116, 0.0
    %v120 = vld [vmem:[#allocation2 + $0xa0] sm:$0xff]
    %v121 = vld [vmem:[#allocation2 + $0xa8] sm:$0xff]
    %v122 = vld [vmem:[#allocation2 + $0xb0] sm:$0xff]
    %v123 = vld [vmem:[#allocation2 + $0xb8] sm:$0xff]
    %v124 = vld [vmem:[%s2 + $0x2] sm:$0x1]
    %v125 = vperm.slane %v124, 0
    %vm126 = vcmask 261120
    %v128 = vsel %vm126, %v118, 0
    %v131 = vsel %vm126, %v119, 0
    %133 = vmatpush.msra.mxu0 0.0
    %134 = vmatpush.msra.mxu0 0.0
    %135 = vmatpush.msra.mxu0 0.0
    %136 = vmatpush.msra.mxu0 0.0
    %137 = vmatpush.msra.mxu0 0.0
    %138 = vmatpush.msra.mxu0 0.0
    %139 = vmatpush.msra.mxu0 0.0
    %140 = vmatpush.msra.mxu0 0.0
    %141 = vmatpush.msra.mxu0 0.0
    %142 = vmatpush.msra.mxu0 0.0
    %143 = vmatpush.msra.mxu0 0.0
    %144 = vmatpush.msra.mxu0 0.0
    %145 = vmatpush.msra.mxu0 %v123
    %146 = vmatpush.msra.mxu0 %v122
    %147 = vmatpush.msra.mxu0 %v121
    %148 = vmatpush.msra.mxu0 %v120
    %149 = vmatmul.f32.gmra.mxu0 %v128
    %v150 = vpop.f32.mrf.mxu0
    %v151 = vadd.f32 %v125, %v150
    %152 = vmatmul.f32.gmra.mxu0 %v131
    %v153 = vpop.f32.mrf.mxu0
    %v154 = vadd.f32 %v125, %v153
    %155 = vdwg.mxu0
    %v156 = vmul.f32 %v151, 0.5
    %v157 = vmul.f32 %v154, 0.5
    %v158 = vmul.f32 %v156, 1.442695
    %v159 = vpow.pop %v158
    %v160 = vmul.f32 %v157, 1.442695
    %v161 = vpow.pop %v160
    %164 = vrot.lane.b32.xlu0 %v159, 40
    %v165 = vpop.permute.xlu0 %164
    %166 = vrot.lane.b32.xlu0 %v161, 40
    %v167 = vpop.permute.xlu0 %166
    %v170 = vmul.f32 %v30, %v165
    %v171 = vmul.f32 %v31, %v167
    %174 = vrot.lane.b32.xlu0 %v170, 80
    %v175 = vpop.permute.xlu0 %174
    %176 = vrot.lane.b32.xlu0 %v171, 80
    %v177 = vpop.permute.xlu0 %176
    %v180 = vadd.f32 %v151, %v175
    %v181 = vadd.f32 %v154, %v177
    %v182 = vld [vmem:[#allocation2 + $0xc0] sm:$0xff]
    %v183 = vld [vmem:[%s2 + $0x3] sm:$0x1]
    %v184 = vperm.slane %v183, 0
    %vm185 = vcmask 64512
    %v187 = vsel %vm185, %v180, 0
    %v190 = vsel %vm185, %v181, 0
    %192 = vmatpush.msra.mxu0 0.0
    %193 = vmatpush.msra.mxu0 0.0
    %194 = vmatpush.msra.mxu0 0.0
    %195 = vmatpush.msra.mxu0 0.0
    %196 = vmatpush.msra.mxu0 0.0
    %197 = vmatpush.msra.mxu0 0.0
    %198 = vmatpush.msra.mxu0 0.0
    %199 = vmatpush.msra.mxu0 0.0
    %200 = vmatpush.msra.mxu0 0.0
    %201 = vmatpush.msra.mxu0 0.0
    %202 = vmatpush.msra.mxu0 0.0
    %203 = vmatpush.msra.mxu0 0.0
    %204 = vmatpush.msra.mxu0 0.0
    %205 = vmatpush.msra.mxu0 0.0
    %206 = vmatpush.msra.mxu0 0.0
    %207 = vmatpush.msra.mxu0 %v182
    %208 = vmatmul.f32.gmra.mxu0 %v187
    %v209 = vpop.f32.mrf.mxu0
    %v210 = vadd.f32 %v184, %v209
    %211 = vmatmul.f32.gmra.mxu0 %v190
    %v212 = vpop.f32.mrf.mxu0
    %v213 = vadd.f32 %v184, %v212
    %214 = vdwg.mxu0
    %v215 = vmax.f32 %v210, 0.0
    %v216 = vmax.f32 %v213, 0.0
    %v217 = vld [vmem:[#allocation2 + $0xc8] sm:$0xff]
    %v218 = vld [vmem:[#allocation2 + $0xd0] sm:$0xff]
    %v219 = vld [vmem:[#allocation2 + $0xd8] sm:$0xff]
    %v220 = vld [vmem:[#allocation2 + $0xe0] sm:$0xff]
    %v221 = vld [vmem:[#allocation2 + $0xe8] sm:$0xff]
    %v222 = vld [vmem:[#allocation2 + $0xf0] sm:$0xff]
    %v223 = vld [vmem:[#allocation2 + $0xf8] sm:$0xff]
    %v224 = vld [vmem:[#allocation2 + $0x100] sm:$0xff]
    %v225 = vld [vmem:[#allocation2 + $0x108] sm:$0xff]
    %v226 = vld [vmem:[#allocation2 + $0x110] sm:$0xff]
    %v227 = vld [vmem:[#allocation2 + $0x118] sm:$0xff]
    %v228 = vld [vmem:[#allocation2 + $0x120] sm:$0xff]
    %v229 = vld [vmem:[#allocation2 + $0x128] sm:$0xff]
    %v230 = vld [vmem:[#allocation2 + $0x130] sm:$0xff]
    %v231 = vld [vmem:[%s2 + $0x4] sm:$0x1]
    %v232 = vperm.slane %v231, 0
    %v234 = vsel %vm88, %v215, 0
    %v237 = vsel %vm88, %v216, 0
    %239 = vmatpush.msra.mxu0 0.0
    %240 = vmatpush.msra.mxu0 0.0
    %241 = vmatpush.msra.mxu0 %v230
    %242 = vmatpush.msra.mxu0 %v229
    %243 = vmatpush.msra.mxu0 %v228
    %244 = vmatpush.msra.mxu0 %v227
    %245 = vmatpush.msra.mxu0 %v226
    %246 = vmatpush.msra.mxu0 %v225
    %247 = vmatpush.msra.mxu0 %v224
    %248 = vmatpush.msra.mxu0 %v223
    %249 = vmatpush.msra.mxu0 %v222
    %250 = vmatpush.msra.mxu0 %v221
    %251 = vmatpush.msra.mxu0 %v220
    %252 = vmatpush.msra.mxu0 %v219
    %253 = vmatpush.msra.mxu0 %v218
    %254 = vmatpush.msra.mxu0 %v217
    %255 = vmatmul.f32.gmra.mxu0 %v234
    %v256 = vpop.f32.mrf.mxu0
    %v257 = vadd.f32 %v232, %v256
    %258 = vmatmul.f32.gmra.mxu0 %v237
    %v259 = vpop.f32.mrf.mxu0
    %v260 = vadd.f32 %v232, %v259
    %261 = vdwg.mxu0
    %v262 = vxor.u32 %v257, 2147483648
    %v263 = vxor.u32 %v260, 2147483648
    %v264 = vmul.f32 %v262, 1.442695
    %v265 = vpow.pop %v264
    %v266 = vmul.f32 %v263, 1.442695
    %v267 = vpow.pop %v266
    %v268 = vadd.f32 %v265, 1.0
    %v269 = vadd.f32 %v267, 1.0
    %v270 = vrcp.pop %v268
    %v271 = vmul.f32 %v268, %v270
    %v272 = vsub.f32 1.0, %v271
    %v273 = vmul.f32 %v270, %v272
    %v274 = vadd.f32 %v270, %v273
    %vm275 = vweird.f32 %v268
    %vm276 = vweird.f32 %v270
    %vm277 = vmor %vm275, %vm276
    %v278 = vsel %vm277, %v270, %v274
    %v279 = vand.u32 2147483647, %v268
    %vm280 = vcmp.eq.f32.partialorder %v279, 8.507059e+37
    %v281 = vand.u32 %v268, 2147483648
    %v282 = vor.u32 1.1754944e-38, %v281
    %v283 = vsel %vm280, %v282, %v278
    %v284 = vmul.f32 1.0, %v283
    %v285 = vrcp.pop %v269
    %v286 = vmul.f32 %v269, %v285
    %v287 = vsub.f32 1.0, %v286
    %v288 = vmul.f32 %v285, %v287
    %v289 = vadd.f32 %v285, %v288
    %vm290 = vweird.f32 %v269
    %vm291 = vweird.f32 %v285
    %vm292 = vmor %vm290, %vm291
    %v293 = vsel %vm292, %v285, %v289
    %v294 = vand.u32 2147483647, %v269
    %vm295 = vcmp.eq.f32.partialorder %v294, 8.507059e+37
    %v296 = vand.u32 %v269, 2147483648
    %v297 = vor.u32 1.1754944e-38, %v296
    %v298 = vsel %vm295, %v297, %v293
    %v299 = vmul.f32 1.0, %v298
    %vm300 = vcmask 392448
    %v301 = vsel %vm300, %v257, -inf
    %302 = vmax.xlane.f32.xlu0 %v301
    %v303 = vpop.xlane.xlu0 %302
    %v304 = vsel %vm300, %v260, -inf
    %305 = vmax.xlane.f32.xlu0 %v304
    %v306 = vpop.xlane.xlu0 %305
    %v307 = vsub.f32 %v257, %v303
    %v308 = vsub.f32 %v260, %v306
    %v309 = vmul.f32 %v307, 1.442695
    %v310 = vpow.pop %v309
    %v311 = vmul.f32 %v308, 1.442695
    %v312 = vpow.pop %v311
    %315 = vrot.lane.b32.xlu0 %v310, 96
    %v316 = vpop.permute.xlu0 %315
    %317 = vrot.lane.b32.xlu0 %v312, 96
    %v318 = vpop.permute.xlu0 %317
    %vm321 = vcmask 130048
    %v322 = vsel %vm321, %v316, 0.0
    %323 = vadd.xlane.f32.xlu0 %v322
    %v324 = vpop.xlane.xlu0 %323
    %v325 = vsel %vm321, %v318, 0.0
    %326 = vadd.xlane.f32.xlu0 %v325
    %v327 = vpop.xlane.xlu0 %326
    %v328 = vrcp.pop %v324
    %v329 = vrcp.pop %v327
    %v330 = vmul.f32 %v310, %v328
    %v331 = vmul.f32 %v312, %v329
    %332 = vst.msk [vmem:[%s3] sm:$0xff] %vm126, %v284
    %333 = vst.msk [vmem:[%s3 + $0x8] sm:$0xff] %vm126, %v299
    %334 = vst.msk [vmem:[%s3] sm:$0xff] %vm300, %v330
    %335 = vst.msk [vmem:[%s3 + $0x8] sm:$0xff] %vm300, %v331
    %338 = vrot.lane.b32.xlu0 %v151, 48
    %v339 = vpop.permute.xlu0 %338
    %340 = vrot.lane.b32.xlu0 %v154, 48
    %v341 = vpop.permute.xlu0 %340
    %vm344 = vcmask 523648
    %345 = vst.msk [vmem:[%s3] sm:$0xff] %vm344, %v339
    %346 = vst.msk [vmem:[%s3 + $0x8] sm:$0xff] %vm344, %v341
    %347 = vrot.lane.b32.xlu0 %v180, 64
    %v348 = vpop.permute.xlu0 %347
    %349 = vrot.lane.b32.xlu0 %v181, 64
    %v350 = vpop.permute.xlu0 %349
    %vm353 = vcmask 589312
    %354 = vst.msk [vmem:[%s3] sm:$0xff] %vm353, %v348
    %355 = vst.msk [vmem:[%s3 + $0x8] sm:$0xff] %vm353, %v350
    %vm356 = vcmask 1048128
    %357 = vst.msk [vmem:[%s3] sm:$0xff] %vm356, 0.0
    %358 = vst.msk [vmem:[%s3 + $0x8] sm:$0xff] %vm356, 0.0
    // Predicated region
    $region18: #{jmvae_forward.1} parent=1 // pred_check
      _
    $region19: #{jmvae_forward.1} parent=1 // pred_check_branch
      %360 = sbr.rel (0) target = $region21
    $region20: #{jmvae_forward.1} parent=1 // pred_region
      _
    $region21: #{jmvae_forward.1} parent=1 // pred_fallthru
      _
    // Predicated region
    $region22: #{jmvae_forward.1} parent=1 // pred_check
      _
    $region23: #{jmvae_forward.1} parent=1 // pred_check_branch
      %362 = sbr.rel (0) target = $region25
    $region24: #{jmvae_forward.1} parent=1 // pred_region
      _
    $region25: #{jmvae_forward.1} parent=1 // pred_fallthru
      _
    %363 = vsyncpa [#allocation3], 1

</llo_original>
